<compile_context>
chip_gen: v6e
topology: v6e:2x2x1
jax: 0.10.0
libtpu: 0.0.40
codegen_flags: <defaults>
</compile_context>

<pallas_src>
import functools

import jax
import jax.numpy as jnp
from jax import lax
from jax.experimental import pallas as pl
from jax.experimental.pallas import tpu as pltpu


def _cdiv(a, b):
    return -(-a // b)


def _round_up(a, b):
    return ((a + b - 1) // b) * b


def create_real_dictionary(T, Drr, Dtheta):
    """Pure-JAX glue: builds the (T, 1+4N) column-normalized dictionary."""
    Drr = Drr.astype(jnp.float32)
    Dtheta = Dtheta.astype(jnp.float32)
    i_arr = jnp.arange(T, dtype=jnp.float32)[:, None]            # (T, 1)
    abs_pow = jnp.abs(Drr)[None, :] ** i_arr                      # |r|^i
    odd = (jnp.arange(T)[:, None] % 2) == 1
    sgn = jnp.sign(Drr)[None, :]
    r_pow = abs_pow * jnp.where(odd, sgn, 1.0)                    # r^i
    neg_r_pow = abs_pow * jnp.where(odd, -sgn, 1.0)               # (-r)^i
    cos_i = jnp.cos(i_arr * Dtheta[None, :])
    sin_i = jnp.sin(i_arr * Dtheta[None, :])
    ones = jnp.ones((T, 1), dtype=jnp.float32)
    dic = jnp.concatenate(
        [ones, r_pow * cos_i, neg_r_pow * cos_i, r_pow * sin_i, neg_r_pow * sin_i],
        axis=1)                                                   # (T, 1+4N)
    G = jnp.sqrt(jnp.sum(dic * dic, axis=0))
    G = jnp.where(G == 0.0, jnp.sqrt(jnp.float32(T)), G)
    return dic / G


def _fista_decode_kernel(scal_ref, d_ref, a_ref, y_ref, out_ref,
                         xa_ref, xb_ref, *, max_iter, k_orig, check_every):
    """One column tile: DtY -> FISTA (chunked early-exit while) -> D @ C."""
    lam = scal_ref[0]                                  # lambda / L
    linv = scal_ref[1]                                 # 1 / L
    D_ = d_ref[...]                                    # (T, K_pad)     resident
    A_bf = a_ref[...].astype(jnp.bfloat16)             # bf16 MXU operand (f32 acc)
    Y_ = y_ref[...]                                    # (T, TM) column tile

    # DtY = (D^T Y) / L   (contract the time axis, no explicit transpose)
    DtY = lax.dot_general(D_, Y_, (((0,), (0,)), ((), ())),
                          preferred_element_type=jnp.float32) * linv   # (K_pad, TM)

    # --- Peel FISTA iteration 0: y_0 = 0 => z = DtY, tt = 0, y_1 = x_1. ----
    x1 = DtY - jnp.clip(DtY, -lam, lam)                # softshrink(DtY, lam)
    xa_ref[...] = x1                                   # slot a: latest iterate x_1
    xb_ref[...] = jnp.zeros_like(x1)                   # slot b: previous    x_0

    t1 = jnp.float32((1.0 + 5.0 ** 0.5) / 2.0)         # t after iteration 0
    # Reference stop: ||x_new - x_old||_2 / K < 1e-4  (sqrt-free squared form).
    thresh2 = jnp.float32((1e-4 * k_orig) ** 2)
    # Remaining iterations 1..max_iter-1, chunked so the reduction + scalar
    # sync hits the critical path only once per `check_every` iterations.
    n_chunks = _cdiv(max_iter - 1, check_every)
    bufs = (xa_ref, xb_ref)

    def cond(carry):
        return carry[3]

    def body(carry):
        c, t_prev, t_cur, _ = carry
        nrm2 = jnp.float32(0.0)
        # check_every is even => the latest iterate is back in slot a at every
        # chunk boundary, so slot roles below are compile-time constants.
        for j in range(check_every):
            cur_ref, prv_ref = (bufs[0], bufs[1]) if j % 2 == 0 else (bufs[1], bufs[0])
            x_cur = cur_ref[...]
            x_prev = prv_ref[...]
            tt = (t_prev - 1.0) / t_cur
            # y_k = x_k*(1+tt) - x_{k-1}*tt, built on the fly (one slab store
            # per iteration instead of two; VALU has slack).
            y = (x_cur * (1.0 + tt) - x_prev * tt).astype(jnp.bfloat16)
            z = jnp.dot(A_bf, y, preferred_element_type=jnp.float32) + DtY
            x_new = z - jnp.clip(z, -lam, lam)          # softshrink
            prv_ref[...] = x_new                        # overwrite the stale slot
            if j == check_every - 1:                    # amortized stop test
                d = x_new - x_cur
                nrm2 = jnp.sum(d * d)
            t_prev, t_cur = t_cur, (1.0 + jnp.sqrt(1.0 + 4.0 * t_cur * t_cur)) / 2.0
        keep = jnp.logical_and(c + 1 < n_chunks, nrm2 >= thresh2)
        return (c + 1, t_prev, t_cur, keep)

    lax.while_loop(cond, body,
                   (jnp.int32(0), jnp.float32(1.0), t1, jnp.array(n_chunks > 0)))

    # check_every is even -> final sparse code lives in slot a.  Decoder: D @ C.
    out_ref[...] = jnp.dot(D_, xa_ref[...], preferred_element_type=jnp.float32)


def ofmodel_forward(Drr, Dtheta, x, *, lambd=0.1, max_iter=100, check_every=4):
    """Full OFModel forward: encoder (FISTA) + decoder, hot path in Pallas."""
    assert check_every % 2 == 0 and check_every >= 2
    B, T, P = x.shape
    D = create_real_dictionary(T, Drr, Dtheta)                  # (T, K)
    K = D.shape[1]

    # Pad K to a sublane-aligned width with zero columns (provably inert:
    # padded code rows stay exactly zero).
    K_pad = _round_up(K, 8)
    D_pad = jnp.pad(D, ((0, 0), (0, K_pad - K)))

    # Hoisted, data-independent FISTA precompute (runs once, plain JAX).
    DtD = jnp.dot(D_pad.T, D_pad, preferred_element_type=jnp.float32)
    L = jnp.sqrt(jnp.sum(DtD * DtD))          # legacy torch.norm(DtD, 2) == Frobenius
    linv = 1.0 / L
    lam = jnp.float32(lambd) * linv
    A = jnp.eye(K_pad, dtype=jnp.float32) - DtD * linv
    scal = jnp.stack([lam, linv]).astype(jnp.float32)           # -> SMEM

    # Fold batch into the column/lane axis: (B, T, P) -> (T, B*P).
    M = B * P
    Y2d = jnp.transpose(x.astype(jnp.float32), (1, 0, 2)).reshape(T, M)

    # Column tiling: compute-bound (~max_iter serialized matmuls per tile), so
    # small balanced lane-dense tiles win — finer-grained early exit, minimal
    # padding, and >= 2 grid steps so v7x's second TensorCore isn't idle.
    tm_cap = 1024
    grid_n = max(2, _cdiv(M, tm_cap)) if M > 128 else 1
    TM = max(128, _round_up(_cdiv(M, grid_n), 128))
    M_pad = grid_n * TM
    if M_pad != M:
        Y2d = jnp.pad(Y2d, ((0, 0), (0, M_pad - M)))            # zero cols: inert

    # VMEM limit from the actual working set (the real constraint is the MXU,
    # not VMEM), with 2x headroom for Mosaic internal scratch.
    try:
        vmem_cap = int(pltpu.get_tpu_info().vmem_capacity_bytes)
    except Exception:  # be robust if the query is unavailable
        vmem_cap = 64 * 1024 * 1024
    work_bytes = 4 * (2 * T * K_pad + 3 * K_pad * K_pad         # D, A (+bf16 copy)
                      + 8 * K_pad * TM                          # code slabs + temps
                      + 4 * T * TM)                             # dbl-buffered Y/out
    vmem_limit = int(min(vmem_cap * 3 // 4, max(32 << 20, 2 * work_bytes)))

    kernel = functools.partial(_fista_decode_kernel, max_iter=max_iter,
                               k_orig=K, check_every=check_every)

    cost = pl.CostEstimate(
        flops=int(M_pad * (4 * T * K_pad + 2 * max_iter * K_pad * K_pad)),
        transcendentals=int(grid_n * max_iter),
        bytes_accessed=int(8 * T * M_pad + 4 * (T * K_pad + K_pad * K_pad + 2)),
    )

    out2d = pl.pallas_call(
        kernel,
        out_shape=jax.ShapeDtypeStruct((T, M_pad), jnp.float32),
        grid=(grid_n,),
        in_specs=[
            pl.BlockSpec(memory_space=pltpu.MemorySpace.SMEM),       # [lam, 1/L]
            pl.BlockSpec((T, K_pad), lambda j: (0, 0)),              # D (resident)
            pl.BlockSpec((K_pad, K_pad), lambda j: (0, 0)),          # A (resident)
            pl.BlockSpec((T, TM), lambda j: (0, j)),                 # Y column tile
        ],
        out_specs=pl.BlockSpec((T, TM), lambda j: (0, j)),
        scratch_shapes=[
            pltpu.VMEM((K_pad, TM), jnp.float32),   # code slot a
            pltpu.VMEM((K_pad, TM), jnp.float32),   # code slot b
        ],
        compiler_params=pltpu.CompilerParams(
            dimension_semantics=("parallel",),
            vmem_limit_bytes=vmem_limit,
        ),
        cost_estimate=cost,
    )(scal, D_pad, A, Y2d)

    out2d = out2d[:, :M]
    return out2d.reshape(T, B, P).transpose(1, 0, 2)            # (B, T, P)


if __name__ == "__main__":
    key = jax.random.PRNGKey(0)
    k1, k2, k3 = jax.random.split(key, 3)

    # Module params: N pole pairs -> dictionary width K = 1 + 4N
    N = 8          # number of poles
    T = 8          # temporal length
    B = 2          # batch
    P = 64         # flattened pixels per frame

    Drr = jax.random.uniform(k1, (N,), jnp.float32, minval=0.5, maxval=1.0)
    Dtheta = jax.random.uniform(k2, (N,), jnp.float32, minval=0.0, maxval=jnp.pi)
    x = jax.random.normal(k3, (B, T, P), jnp.float32)

    fwd = jax.jit(ofmodel_forward)
    out = jax.block_until_ready(fwd(Drr, Dtheta, x))
    assert out.shape == (B, T, P)
    assert bool(jnp.all(jnp.isfinite(out)))
    print("KERNEL_OK")
</pallas_src>

<mosaic_0001>
module attributes {stable_mosaic.version = 11 : i64} {
  func.func @_fista_decode_kernel(%arg0: i32, %arg1: memref<2xf32, #tpu.memory_space<smem>>, %arg2: memref<8x40xf32, #tpu.memory_space<vmem>>, %arg3: memref<40x40xf32, #tpu.memory_space<vmem>>, %arg4: memref<8x128xf32, #tpu.memory_space<vmem>>, %arg5: memref<8x128xf32, #tpu.memory_space<vmem>>, %arg6: memref<40x128xf32, #tpu.memory_space<vmem>>, %arg7: memref<40x128xf32, #tpu.memory_space<vmem>>) attributes {dimension_semantics = [#tpu.dimension_semantics<parallel>], iteration_bounds = array<i64: 1>, scalar_prefetch = 0 : i64, scratch_operands = 2 : i64, tpu.core_type = #tpu.core_type<tc>, window_params = [{transform_indices = @transform_0, window_bounds = array<i64: 2>}, {pipeline_mode = #tpu.pipeline_mode<synchronous>, transform_indices = @transform_1, window_bounds = array<i64: 8, 40>}, {pipeline_mode = #tpu.pipeline_mode<synchronous>, transform_indices = @transform_2, window_bounds = array<i64: 40, 40>}, {transform_indices = @transform_3, window_bounds = array<i64: 8, 128>}, {transform_indices = @transform_4, window_bounds = array<i64: 8, 128>}]} {
    %c0 = arith.constant 0 : index
    %0 = memref.load %arg1[%c0] : memref<2xf32, #tpu.memory_space<smem>>
    %c1 = arith.constant 1 : index
    %1 = memref.load %arg1[%c1] : memref<2xf32, #tpu.memory_space<smem>>
    %c0_0 = arith.constant 0 : index
    %c0_1 = arith.constant 0 : index
    %2 = vector.load %arg2[%c0_0, %c0_1] : memref<8x40xf32, #tpu.memory_space<vmem>>, vector<8x40xf32>
    %c0_2 = arith.constant 0 : index
    %c0_3 = arith.constant 0 : index
    %3 = vector.load %arg3[%c0_2, %c0_3] : memref<40x40xf32, #tpu.memory_space<vmem>>, vector<40x40xf32>
    %4 = arith.truncf %3 : vector<40x40xf32> to vector<40x40xbf16>
    %c0_4 = arith.constant 0 : index
    %c0_5 = arith.constant 0 : index
    %5 = vector.load %arg4[%c0_4, %c0_5] : memref<8x128xf32, #tpu.memory_space<vmem>>, vector<8x128xf32>
    %cst = arith.constant dense<0.000000e+00> : vector<40x128xf32>
    %6 = tpu.matmul %2, %5, %cst {dimension_numbers = #tpu.dot_dimension_numbers<[0], [0], [1], [1], [0, 1, 1, 1], [], []>} : vector<8x40xf32>, vector<8x128xf32>, vector<40x128xf32> -> vector<40x128xf32>
    %7 = vector.broadcast %1 : f32 to vector<40x128xf32>
    %8 = arith.mulf %6, %7 : vector<40x128xf32>
    %cst_6 = arith.constant 0.000000e+00 : f32
    %9 = arith.subf %cst_6, %0 : f32
    %10 = vector.broadcast %9 : f32 to vector<40x128xf32>
    %11 = arith.maximumf %10, %8 : vector<40x128xf32>
    %12 = vector.broadcast %0 : f32 to vector<40x128xf32>
    %13 = arith.minimumf %12, %11 : vector<40x128xf32>
    %14 = arith.subf %8, %13 : vector<40x128xf32>
    %c0_7 = arith.constant 0 : index
    %c0_8 = arith.constant 0 : index
    %15 = vector.load %arg6[%c0_7, %c0_8] : memref<40x128xf32, #tpu.memory_space<vmem>>, vector<40x128xf32>
    tpu.vector_store %arg6[%c0_7, %c0_8], %14 {strides = array<i32>} : memref<40x128xf32, #tpu.memory_space<vmem>>, vector<40x128xf32>,
    %cst_9 = arith.constant 0.000000e+00 : f32
    %16 = vector.broadcast %cst_9 : f32 to vector<40x128xf32>
    %c0_10 = arith.constant 0 : index
    %c0_11 = arith.constant 0 : index
    %17 = vector.load %arg7[%c0_10, %c0_11] : memref<40x128xf32, #tpu.memory_space<vmem>>, vector<40x128xf32>
    tpu.vector_store %arg7[%c0_10, %c0_11], %16 {strides = array<i32>} : memref<40x128xf32, #tpu.memory_space<vmem>>, vector<40x128xf32>,
    %cst_12 = arith.constant 1.089000e-05 : f32
    %c0_i32 = arith.constant 0 : i32
    %cst_13 = arith.constant 1.000000e+00 : f32
    %cst_14 = arith.constant 1.61803401 : f32
    %true = arith.constant true
    %18:4 = scf.while (%arg8 = %c0_i32, %arg9 = %cst_13, %arg10 = %cst_14, %arg11 = %true) : (i32, f32, f32, i1) -> (i32, f32, f32, i1) {
      scf.condition(%arg11) %arg8, %arg9, %arg10, %arg11 : i32, f32, f32, i1
    } do {
    ^bb0(%arg8: i32, %arg9: f32, %arg10: f32, %arg11: i1):
      %c0_20 = arith.constant 0 : index
      %c0_21 = arith.constant 0 : index
      %22 = vector.load %arg6[%c0_20, %c0_21] : memref<40x128xf32, #tpu.memory_space<vmem>>, vector<40x128xf32>
      %c0_22 = arith.constant 0 : index
      %c0_23 = arith.constant 0 : index
      %23 = vector.load %arg7[%c0_22, %c0_23] : memref<40x128xf32, #tpu.memory_space<vmem>>, vector<40x128xf32>
      %cst_24 = arith.constant 1.000000e+00 : f32
      %24 = arith.subf %arg9, %cst_24 : f32
      %25 = arith.divf %24, %arg10 : f32
      %cst_25 = arith.constant 1.000000e+00 : f32
      %26 = arith.addf %cst_25, %25 : f32
      %27 = vector.broadcast %26 : f32 to vector<40x128xf32>
      %28 = arith.mulf %22, %27 : vector<40x128xf32>
      %29 = vector.broadcast %25 : f32 to vector<40x128xf32>
      %30 = arith.mulf %23, %29 : vector<40x128xf32>
      %31 = arith.subf %28, %30 : vector<40x128xf32>
      %32 = arith.truncf %31 : vector<40x128xf32> to vector<40x128xbf16>
      %cst_26 = arith.constant dense<0.000000e+00> : vector<40x128xf32>
      %33 = tpu.matmul %4, %32, %cst_26 {dimension_numbers = #tpu.dot_dimension_numbers<[1], [0], [0], [1], [0, 0, 1, 1], [], []>} : vector<40x40xbf16>, vector<40x128xbf16>, vector<40x128xf32> -> vector<40x128xf32>
      %34 = arith.addf %33, %8 : vector<40x128xf32>
      %cst_27 = arith.constant 0.000000e+00 : f32
      %35 = arith.subf %cst_27, %0 : f32
      %36 = vector.broadcast %35 : f32 to vector<40x128xf32>
      %37 = arith.maximumf %36, %34 : vector<40x128xf32>
      %38 = vector.broadcast %0 : f32 to vector<40x128xf32>
      %39 = arith.minimumf %38, %37 : vector<40x128xf32>
      %40 = arith.subf %34, %39 : vector<40x128xf32>
      %c0_28 = arith.constant 0 : index
      %c0_29 = arith.constant 0 : index
      %41 = vector.load %arg7[%c0_28, %c0_29] : memref<40x128xf32, #tpu.memory_space<vmem>>, vector<40x128xf32>
      tpu.vector_store %arg7[%c0_28, %c0_29], %40 {strides = array<i32>} : memref<40x128xf32, #tpu.memory_space<vmem>>, vector<40x128xf32>,
      %cst_30 = arith.constant 4.000000e+00 : f32
      %42 = arith.mulf %cst_30, %arg10 : f32
      %43 = arith.mulf %42, %arg10 : f32
      %cst_31 = arith.constant 1.000000e+00 : f32
      %44 = arith.addf %cst_31, %43 : f32
      %45 = math.sqrt %44 : f32
      %cst_32 = arith.constant 1.000000e+00 : f32
      %46 = arith.addf %cst_32, %45 : f32
      %cst_33 = arith.constant 2.000000e+00 : f32
      %47 = arith.divf %46, %cst_33 : f32
      %c0_34 = arith.constant 0 : index
      %c0_35 = arith.constant 0 : index
      %48 = vector.load %arg7[%c0_34, %c0_35] : memref<40x128xf32, #tpu.memory_space<vmem>>, vector<40x128xf32>
      %c0_36 = arith.constant 0 : index
      %c0_37 = arith.constant 0 : index
      %49 = vector.load %arg6[%c0_36, %c0_37] : memref<40x128xf32, #tpu.memory_space<vmem>>, vector<40x128xf32>
      %cst_38 = arith.constant 1.000000e+00 : f32
      %50 = arith.subf %arg10, %cst_38 : f32
      %51 = arith.divf %50, %47 : f32
      %cst_39 = arith.constant 1.000000e+00 : f32
      %52 = arith.addf %cst_39, %51 : f32
      %53 = vector.broadcast %52 : f32 to vector<40x128xf32>
      %54 = arith.mulf %48, %53 : vector<40x128xf32>
      %55 = vector.broadcast %51 : f32 to vector<40x128xf32>
      %56 = arith.mulf %49, %55 : vector<40x128xf32>
      %57 = arith.subf %54, %56 : vector<40x128xf32>
      %58 = arith.truncf %57 : vector<40x128xf32> to vector<40x128xbf16>
      %cst_40 = arith.constant dense<0.000000e+00> : vector<40x128xf32>
      %59 = tpu.matmul %4, %58, %cst_40 {dimension_numbers = #tpu.dot_dimension_numbers<[1], [0], [0], [1], [0, 0, 1, 1], [], []>} : vector<40x40xbf16>, vector<40x128xbf16>, vector<40x128xf32> -> vector<40x128xf32>
      %60 = arith.addf %59, %8 : vector<40x128xf32>
      %cst_41 = arith.constant 0.000000e+00 : f32
      %61 = arith.subf %cst_41, %0 : f32
      %62 = vector.broadcast %61 : f32 to vector<40x128xf32>
      %63 = arith.maximumf %62, %60 : vector<40x128xf32>
      %64 = vector.broadcast %0 : f32 to vector<40x128xf32>
      %65 = arith.minimumf %64, %63 : vector<40x128xf32>
      %66 = arith.subf %60, %65 : vector<40x128xf32>
      %c0_42 = arith.constant 0 : index
      %c0_43 = arith.constant 0 : index
      %67 = vector.load %arg6[%c0_42, %c0_43] : memref<40x128xf32, #tpu.memory_space<vmem>>, vector<40x128xf32>
      tpu.vector_store %arg6[%c0_42, %c0_43], %66 {strides = array<i32>} : memref<40x128xf32, #tpu.memory_space<vmem>>, vector<40x128xf32>,
      %cst_44 = arith.constant 4.000000e+00 : f32
      %68 = arith.mulf %cst_44, %47 : f32
      %69 = arith.mulf %68, %47 : f32
      %cst_45 = arith.constant 1.000000e+00 : f32
      %70 = arith.addf %cst_45, %69 : f32
      %71 = math.sqrt %70 : f32
      %cst_46 = arith.constant 1.000000e+00 : f32
      %72 = arith.addf %cst_46, %71 : f32
      %cst_47 = arith.constant 2.000000e+00 : f32
      %73 = arith.divf %72, %cst_47 : f32
      %c0_48 = arith.constant 0 : index
      %c0_49 = arith.constant 0 : index
      %74 = vector.load %arg6[%c0_48, %c0_49] : memref<40x128xf32, #tpu.memory_space<vmem>>, vector<40x128xf32>
      %c0_50 = arith.constant 0 : index
      %c0_51 = arith.constant 0 : index
      %75 = vector.load %arg7[%c0_50, %c0_51] : memref<40x128xf32, #tpu.memory_space<vmem>>, vector<40x128xf32>
      %cst_52 = arith.constant 1.000000e+00 : f32
      %76 = arith.subf %47, %cst_52 : f32
      %77 = arith.divf %76, %73 : f32
      %cst_53 = arith.constant 1.000000e+00 : f32
      %78 = arith.addf %cst_53, %77 : f32
      %79 = vector.broadcast %78 : f32 to vector<40x128xf32>
      %80 = arith.mulf %74, %79 : vector<40x128xf32>
      %81 = vector.broadcast %77 : f32 to vector<40x128xf32>
      %82 = arith.mulf %75, %81 : vector<40x128xf32>
      %83 = arith.subf %80, %82 : vector<40x128xf32>
      %84 = arith.truncf %83 : vector<40x128xf32> to vector<40x128xbf16>
      %cst_54 = arith.constant dense<0.000000e+00> : vector<40x128xf32>
      %85 = tpu.matmul %4, %84, %cst_54 {dimension_numbers = #tpu.dot_dimension_numbers<[1], [0], [0], [1], [0, 0, 1, 1], [], []>} : vector<40x40xbf16>, vector<40x128xbf16>, vector<40x128xf32> -> vector<40x128xf32>
      %86 = arith.addf %85, %8 : vector<40x128xf32>
      %cst_55 = arith.constant 0.000000e+00 : f32
      %87 = arith.subf %cst_55, %0 : f32
      %88 = vector.broadcast %87 : f32 to vector<40x128xf32>
      %89 = arith.maximumf %88, %86 : vector<40x128xf32>
      %90 = vector.broadcast %0 : f32 to vector<40x128xf32>
      %91 = arith.minimumf %90, %89 : vector<40x128xf32>
      %92 = arith.subf %86, %91 : vector<40x128xf32>
      %c0_56 = arith.constant 0 : index
      %c0_57 = arith.constant 0 : index
      %93 = vector.load %arg7[%c0_56, %c0_57] : memref<40x128xf32, #tpu.memory_space<vmem>>, vector<40x128xf32>
      tpu.vector_store %arg7[%c0_56, %c0_57], %92 {strides = array<i32>} : memref<40x128xf32, #tpu.memory_space<vmem>>, vector<40x128xf32>,
      %cst_58 = arith.constant 4.000000e+00 : f32
      %94 = arith.mulf %cst_58, %73 : f32
      %95 = arith.mulf %94, %73 : f32
      %cst_59 = arith.constant 1.000000e+00 : f32
      %96 = arith.addf %cst_59, %95 : f32
      %97 = math.sqrt %96 : f32
      %cst_60 = arith.constant 1.000000e+00 : f32
      %98 = arith.addf %cst_60, %97 : f32
      %cst_61 = arith.constant 2.000000e+00 : f32
      %99 = arith.divf %98, %cst_61 : f32
      %c0_62 = arith.constant 0 : index
      %c0_63 = arith.constant 0 : index
      %100 = vector.load %arg7[%c0_62, %c0_63] : memref<40x128xf32, #tpu.memory_space<vmem>>, vector<40x128xf32>
      %c0_64 = arith.constant 0 : index
      %c0_65 = arith.constant 0 : index
      %101 = vector.load %arg6[%c0_64, %c0_65] : memref<40x128xf32, #tpu.memory_space<vmem>>, vector<40x128xf32>
      %cst_66 = arith.constant 1.000000e+00 : f32
      %102 = arith.subf %73, %cst_66 : f32
      %103 = arith.divf %102, %99 : f32
      %cst_67 = arith.constant 1.000000e+00 : f32
      %104 = arith.addf %cst_67, %103 : f32
      %105 = vector.broadcast %104 : f32 to vector<40x128xf32>
      %106 = arith.mulf %100, %105 : vector<40x128xf32>
      %107 = vector.broadcast %103 : f32 to vector<40x128xf32>
      %108 = arith.mulf %101, %107 : vector<40x128xf32>
      %109 = arith.subf %106, %108 : vector<40x128xf32>
      %110 = arith.truncf %109 : vector<40x128xf32> to vector<40x128xbf16>
      %cst_68 = arith.constant dense<0.000000e+00> : vector<40x128xf32>
      %111 = tpu.matmul %4, %110, %cst_68 {dimension_numbers = #tpu.dot_dimension_numbers<[1], [0], [0], [1], [0, 0, 1, 1], [], []>} : vector<40x40xbf16>, vector<40x128xbf16>, vector<40x128xf32> -> vector<40x128xf32>
      %112 = arith.addf %111, %8 : vector<40x128xf32>
      %cst_69 = arith.constant 0.000000e+00 : f32
      %113 = arith.subf %cst_69, %0 : f32
      %114 = vector.broadcast %113 : f32 to vector<40x128xf32>
      %115 = arith.maximumf %114, %112 : vector<40x128xf32>
      %116 = vector.broadcast %0 : f32 to vector<40x128xf32>
      %117 = arith.minimumf %116, %115 : vector<40x128xf32>
      %118 = arith.subf %112, %117 : vector<40x128xf32>
      %c0_70 = arith.constant 0 : index
      %c0_71 = arith.constant 0 : index
      %119 = vector.load %arg6[%c0_70, %c0_71] : memref<40x128xf32, #tpu.memory_space<vmem>>, vector<40x128xf32>
      tpu.vector_store %arg6[%c0_70, %c0_71], %118 {strides = array<i32>} : memref<40x128xf32, #tpu.memory_space<vmem>>, vector<40x128xf32>,
      %120 = arith.subf %118, %100 : vector<40x128xf32>
      %121 = arith.mulf %120, %120 : vector<40x128xf32>
      %122 = vector.shape_cast %121 : vector<40x128xf32> to vector<1x40x128xf32>
      %cst_72 = arith.constant dense<0.000000e+00> : vector<1xf32>
      %123 = vector.multi_reduction <add>, %122, %cst_72 [1, 2] : vector<1x40x128xf32> to vector<1xf32>
      %124 = vector.shape_cast %123 : vector<1xf32> to vector<1x1x1xf32>
      %125 = vector.extract %124[0, 0, 0] : f32 from vector<1x1x1xf32>
      %cst_73 = arith.constant 4.000000e+00 : f32
      %126 = arith.mulf %cst_73, %99 : f32
      %127 = arith.mulf %126, %99 : f32
      %cst_74 = arith.constant 1.000000e+00 : f32
      %128 = arith.addf %cst_74, %127 : f32
      %129 = math.sqrt %128 : f32
      %cst_75 = arith.constant 1.000000e+00 : f32
      %130 = arith.addf %cst_75, %129 : f32
      %cst_76 = arith.constant 2.000000e+00 : f32
      %131 = arith.divf %130, %cst_76 : f32
      %c1_i32 = arith.constant 1 : i32
      %132 = arith.addi %arg8, %c1_i32 : i32
      %c25_i32 = arith.constant 25 : i32
      %133 = arith.cmpi slt, %132, %c25_i32 : i32
      %134 = arith.cmpf oge, %125, %cst_12 : f32
      %135 = arith.andi %133, %134 : i1
      %c1_i32_77 = arith.constant 1 : i32
      %136 = arith.addi %arg8, %c1_i32_77 : i32
      scf.yield %136, %99, %131, %135 : i32, f32, f32, i1
    }
    %c0_15 = arith.constant 0 : index
    %c0_16 = arith.constant 0 : index
    %19 = vector.load %arg6[%c0_15, %c0_16] : memref<40x128xf32, #tpu.memory_space<vmem>>, vector<40x128xf32>
    %cst_17 = arith.constant dense<0.000000e+00> : vector<8x128xf32>
    %20 = tpu.matmul %2, %19, %cst_17 {dimension_numbers = #tpu.dot_dimension_numbers<[1], [0], [0], [1], [0, 0, 1, 1], [], []>} : vector<8x40xf32>, vector<40x128xf32>, vector<8x128xf32> -> vector<8x128xf32>
    %c0_18 = arith.constant 0 : index
    %c0_19 = arith.constant 0 : index
    %21 = vector.load %arg5[%c0_18, %c0_19] : memref<8x128xf32, #tpu.memory_space<vmem>>, vector<8x128xf32>
    tpu.vector_store %arg5[%c0_18, %c0_19], %20 {strides = array<i32>} : memref<8x128xf32, #tpu.memory_space<vmem>>, vector<8x128xf32>,
    return
  }
  func.func @transform_0(%arg0: i32) -> i32 {
    %c0_i32 = arith.constant 0 : i32
    %c0_i32_0 = arith.constant 0 : i32
    return %c0_i32 : i32
  }
  func.func @transform_1(%arg0: i32) -> (i32, i32) {
    %c0_i32 = arith.constant 0 : i32
    %c0_i32_0 = arith.constant 0 : i32
    %c0_i32_1 = arith.constant 0 : i32
    return %c0_i32, %c0_i32_0 : i32, i32
  }
  func.func @transform_2(%arg0: i32) -> (i32, i32) {
    %c0_i32 = arith.constant 0 : i32
    %c0_i32_0 = arith.constant 0 : i32
    %c0_i32_1 = arith.constant 0 : i32
    return %c0_i32, %c0_i32_0 : i32, i32
  }
  func.func @transform_3(%arg0: i32) -> (i32, i32) {
    %c0_i32 = arith.constant 0 : i32
    %c0_i32_0 = arith.constant 0 : i32
    return %c0_i32, %arg0 : i32, i32
  }
  func.func @transform_4(%arg0: i32) -> (i32, i32) {
    %c0_i32 = arith.constant 0 : i32
    %c0_i32_0 = arith.constant 0 : i32
    return %c0_i32, %arg0 : i32, i32
  }
}

</mosaic_0001>

<llo_original>
// kernel: ofmodel_forward.1
$region0: #{ofmodel_forward.1}
  #allocation0 [shape = 'u32[]', space=smem, size = 0x4, offset = 0x4, fixed_abs, tag = 'smem constant byte address 0x4 - core index']
  #allocation1 [shape = 'u32[144,128]{1,0:T(1,128)}', space=vmem, size = 0x12000, scoped, tag = 'internal scratch']
  #allocation2 [shape = 'f32[40,128]{1,0:T(8,128)}', space=vmem, size = 0x5000, scoped, tag = 'scratch operand']
  #allocation3 [shape = 'f32[40,128]{1,0:T(8,128)}', space=vmem, size = 0x5000, scoped, tag = 'scratch operand']
  %s0 = inlined_call_operand.vmem [shape: f32[2], index: 0, kind: input, shape index: {}]
  %s1 = inlined_call_operand.vmem [shape: f32[8,40], index: 1, kind: input, shape index: {}]
  %s2 = inlined_call_operand.vmem [shape: f32[40,40], index: 2, kind: input, shape index: {}]
  %s3 = inlined_call_operand.vmem [shape: f32[8,128], index: 3, kind: input, shape index: {}]
  %s4 = inlined_call_operand.vmem [shape: f32[8,128], index: 4, kind: output, shape index: {}]
  %s5 = sld [smem:[#allocation0]]
  $region37: #{ofmodel_forward.1} parent=0
    _
  %s7 = ssub.s32 1, %s5
  %s8 = scalar_select 0, %s7, %s5
  $region1: #{ofmodel_forward.1} parent=0
    #allocation4 [shape = 'u8[512]{0}', space=smem, size = 0x200, scoped, tag = 'input window, operand 0, single buffered']
    #allocation5 [shape = 's32[1]{0}', space=sflag, size = 0x4, scoped, tag = 'scoped memory for ofmodel_forward.1']
    %9 = vsyncpa [#allocation5], 0
    // Predicated region
    $region2: #{ofmodel_forward.1} parent=1 // pred_check
      _
    $region3: #{ofmodel_forward.1} parent=1 // pred_check_branch
      %11 = sbr.rel (0) target = $region5
    $region4: #{ofmodel_forward.1} parent=1 // pred_region
      %s13 = ssub.s32 16, 16
      %14 = vsyncadd [#allocation5], %s13
      %s16 = sshll.u32 %s0, 4
      %s17 = int_to_ptr.vmem [resolvable:$true] %s16
      %19 = dma.vmem_to_smem %s17, 16, [#allocation4], [#allocation5]
    $region5: #{ofmodel_forward.1} parent=1 // pred_fallthru
      _
    // Predicated region
    $region6: #{ofmodel_forward.1} parent=1 // pred_check
      _
    $region7: #{ofmodel_forward.1} parent=1 // pred_check_branch
      %21 = sbr.rel (0) target = $region9
    $region8: #{ofmodel_forward.1} parent=1 // pred_region
      _
    $region9: #{ofmodel_forward.1} parent=1 // pred_fallthru
      _
    // Predicated region
    $region10: #{ofmodel_forward.1} parent=1 // pred_check
      _
    $region11: #{ofmodel_forward.1} parent=1 // pred_check_branch
      %23 = sbr.rel (0) target = $region13
    $region12: #{ofmodel_forward.1} parent=1 // pred_region
      _
    $region13: #{ofmodel_forward.1} parent=1 // pred_fallthru
      _
    // Predicated region
    $region14: #{ofmodel_forward.1} parent=1 // pred_check
      _
    $region15: #{ofmodel_forward.1} parent=1 // pred_check_branch
      %25 = sbr.rel (0) target = $region17
    $region16: #{ofmodel_forward.1} parent=1 // pred_region
      _
    $region17: #{ofmodel_forward.1} parent=1 // pred_fallthru
      _
    // Predicated region
    $region18: #{ofmodel_forward.1} parent=1 // pred_check
      _
    $region19: #{ofmodel_forward.1} parent=1 // pred_check_branch
      %27 = sbr.rel (0) target = $region21
    $region20: #{ofmodel_forward.1} parent=1 // pred_region
      %28 = dma.done [#allocation5], 16
    $region21: #{ofmodel_forward.1} parent=1 // pred_fallthru
      _
    %29 = sfence
    %s31 = sld [smem:[#allocation4]]
    %s32 = sld [smem:[#allocation4 + $0x1]]
    %v33 = vld [vmem:[%s1] sm:$0xff]
    %v34 = vld [vmem:[%s2] sm:$0xff]
    %v35 = vld [vmem:[%s2 + $0x8] sm:$0xff]
    %v36 = vld [vmem:[%s2 + $0x10] sm:$0xff]
    %v37 = vld [vmem:[%s2 + $0x18] sm:$0xff]
    %v38 = vld [vmem:[%s2 + $0x20] sm:$0xff]
    %v39 = vpack.c.bf16 %v35, %v34
    %v40 = vpack.c.bf16 %v37, %v36
    %v41 = vpack.c.bf16 %v38, %v38
    %v42 = vld [vmem:[%s3] sm:$0xff]
    %43 = vxpose.xlu0.b32.start [1/16] %v33, 128
    %44 = vxpose.xlu0.b32.cont [2/16] 0.0, 128
    %45 = vxpose.xlu0.b32.cont [3/16] 0.0, 128
    %46 = vxpose.xlu0.b32.cont [4/16] 0.0, 128
    %47 = vxpose.xlu0.b32.cont [5/16] 0.0, 128
    %48 = vxpose.xlu0.b32.cont [6/16] 0.0, 128
    %49 = vxpose.xlu0.b32.cont [7/16] 0.0, 128
    %50 = vxpose.xlu0.b32.cont [8/16] 0.0, 128
    %51 = vxpose.xlu0.b32.cont [9/16] 0.0, 128
    %52 = vxpose.xlu0.b32.cont [10/16] 0.0, 128
    %53 = vxpose.xlu0.b32.cont [11/16] 0.0, 128
    %54 = vxpose.xlu0.b32.cont [12/16] 0.0, 128
    %55 = vxpose.xlu0.b32.cont [13/16] 0.0, 128
    %56 = vxpose.xlu0.b32.cont [14/16] 0.0, 128
    %57 = vxpose.xlu0.b32.cont [15/16] 0.0, 128
    %58 = vxpose.xlu0.b32.end [16/16] 0.0, 128
    %v59 = vpop.trf.xlu0
    %v60 = vpop.trf.xlu0
    %v61 = vpop.trf.xlu0
    %v62 = vpop.trf.xlu0
    %v63 = vpop.trf.xlu0
    %v64 = vpop.trf.xlu0
    %v65 = vpop.trf.xlu0
    %v66 = vpop.trf.xlu0
    %v67 = vpop.trf.xlu0
    %v68 = vpop.trf.xlu0
    %v69 = vpop.trf.xlu0
    %v70 = vpop.trf.xlu0
    %v71 = vpop.trf.xlu0
    %v72 = vpop.trf.xlu0
    %v73 = vpop.trf.xlu0
    %v74 = vpop.trf.xlu0
    %vm75 = vcmask 64512
    %v77 = vsel %vm75, %v59, 0
    %v80 = vsel %vm75, %v60, 0
    %v83 = vsel %vm75, %v61, 0
    %v86 = vsel %vm75, %v62, 0
    %v89 = vsel %vm75, %v63, 0
    %91 = vmatprep.subr.mxu0 0.0
    %92 = vmatpush1.msra.mxu0 0.0
    %93 = vmatprep.subr.mxu0 0.0
    %94 = vmatpush1.msra.mxu0 0.0
    %95 = vmatprep.subr.mxu0 0.0
    %96 = vmatpush1.msra.mxu0 0.0
    %97 = vmatprep.subr.mxu0 0.0
    %98 = vmatpush1.msra.mxu0 0.0
    %99 = vmatprep.subr.mxu0 0.0
    %100 = vmatpush1.msra.mxu0 0.0
    %101 = vmatprep.subr.mxu0 0.0
    %102 = vmatpush1.msra.mxu0 0.0
    %103 = vmatprep.subr.mxu0 0.0
    %104 = vmatpush1.msra.mxu0 0.0
    %105 = vmatprep.subr.mxu0 0.0
    %106 = vmatpush1.msra.mxu0 0.0
    %107 = vmatprep.subr.mxu0 0.0
    %108 = vmatpush1.msra.mxu0 0.0
    %109 = vmatprep.subr.mxu0 0.0
    %110 = vmatpush1.msra.mxu0 0.0
    %111 = vmatprep.subr.mxu0 0.0
    %112 = vmatpush1.msra.mxu0 0.0
    %113 = vmatprep.subr.mxu0 0.0
    %114 = vmatpush1.msra.mxu0 0.0
    %115 = vmatprep.subr.mxu0 0.0
    %116 = vmatpush1.msra.mxu0 0.0
    %117 = vmatprep.subr.mxu0 0.0
    %118 = vmatpush1.msra.mxu0 0.0
    %119 = vmatprep.subr.mxu0 0.0
    %120 = vmatpush1.msra.mxu0 0.0
    %121 = vmatprep.subr.mxu0 0.0
    %122 = vmatpush1.msra.mxu0 %v42
    %123 = vmatprep.subr.mxu0 0.0
    %124 = vmatpush2.msra.mxu0 0.0
    %125 = vmatprep.subr.mxu0 0.0
    %126 = vmatpush2.msra.mxu0 0.0
    %127 = vmatprep.subr.mxu0 0.0
    %128 = vmatpush2.msra.mxu0 0.0
    %129 = vmatprep.subr.mxu0 0.0
    %130 = vmatpush2.msra.mxu0 0.0
    %131 = vmatprep.subr.mxu0 0.0
    %132 = vmatpush2.msra.mxu0 0.0
    %133 = vmatprep.subr.mxu0 0.0
    %134 = vmatpush2.msra.mxu0 0.0
    %135 = vmatprep.subr.mxu0 0.0
    %136 = vmatpush2.msra.mxu0 0.0
    %137 = vmatprep.subr.mxu0 0.0
    %138 = vmatpush2.msra.mxu0 0.0
    %139 = vmatprep.subr.mxu0 0.0
    %140 = vmatpush2.msra.mxu0 0.0
    %141 = vmatprep.subr.mxu0 0.0
    %142 = vmatpush2.msra.mxu0 0.0
    %143 = vmatprep.subr.mxu0 0.0
    %144 = vmatpush2.msra.mxu0 0.0
    %145 = vmatprep.subr.mxu0 0.0
    %146 = vmatpush2.msra.mxu0 0.0
    %147 = vmatprep.subr.mxu0 0.0
    %148 = vmatpush2.msra.mxu0 0.0
    %149 = vmatprep.subr.mxu0 0.0
    %150 = vmatpush2.msra.mxu0 0.0
    %151 = vmatprep.subr.mxu0 0.0
    %152 = vmatpush2.msra.mxu0 0.0
    %153 = vmatprep.subr.mxu0 0.0
    %154 = vmatpush2.msra.mxu0 0.0
    %155 = vmatprep.mubr.f32.mxu0 0.0
    %156 = vmatmul.mubr.f32.gmra.mxu0 %v77
    %v157 = vpop.f32.mrf.mxu0
    %v158 = vadd.f32 0.0, %v157
    %v159 = vpop.f32.mrf.mxu0
    %160 = vmatprep.mubr.f32.mxu0 0.0
    %161 = vmatmul.mubr.f32.gmra.mxu0 %v80
    %v162 = vpop.f32.mrf.mxu0
    %v163 = vadd.f32 0.0, %v162
    %v164 = vpop.f32.mrf.mxu0
    %165 = vmatprep.mubr.f32.mxu0 0.0
    %166 = vmatmul.mubr.f32.gmra.mxu0 %v83
    %v167 = vpop.f32.mrf.mxu0
    %v168 = vadd.f32 0.0, %v167
    %v169 = vpop.f32.mrf.mxu0
    %170 = vmatprep.mubr.f32.mxu0 0.0
    %171 = vmatmul.mubr.f32.gmra.mxu0 %v86
    %v172 = vpop.f32.mrf.mxu0
    %v173 = vadd.f32 0.0, %v172
    %v174 = vpop.f32.mrf.mxu0
    %175 = vmatprep.mubr.f32.mxu0 0.0
    %176 = vmatmul.mubr.f32.gmra.mxu0 %v89
    %v177 = vpop.f32.mrf.mxu0
    %v178 = vadd.f32 0.0, %v177
    %v179 = vpop.f32.mrf.mxu0
    %180 = vdwg.mxu0
    %v181 = vstv %s32
    %v182 = vmul.f32 %v158, %v181
    %v183 = vmul.f32 %v163, %v181
    %v184 = vmul.f32 %v168, %v181
    %v185 = vmul.f32 %v173, %v181
    %v186 = vmul.f32 %v178, %v181
    %s187 = ssub.f32 0.0, %s31
    %v188 = vstv %s187
    %v189 = vmax.f32 %v188, %v182
    %v190 = vmax.f32 %v188, %v183
    %v191 = vmax.f32 %v188, %v184
    %v192 = vmax.f32 %v188, %v185
    %v193 = vmax.f32 %v188, %v186
    %v194 = vstv %s31
    %v195 = vmin.f32 %v194, %v189
    %v196 = vmin.f32 %v194, %v190
    %v197 = vmin.f32 %v194, %v191
    %v198 = vmin.f32 %v194, %v192
    %v199 = vmin.f32 %v194, %v193
    %v200 = vsub.f32 %v182, %v195
    %v201 = vsub.f32 %v183, %v196
    %v202 = vsub.f32 %v184, %v197
    %v203 = vsub.f32 %v185, %v198
    %v204 = vsub.f32 %v186, %v199
    %205 = vst [vmem:[#allocation2] sm:$0xff] %v200
    %206 = vst [vmem:[#allocation2 + $0x8] sm:$0xff] %v201
    %207 = vst [vmem:[#allocation2 + $0x10] sm:$0xff] %v202
    %208 = vst [vmem:[#allocation2 + $0x18] sm:$0xff] %v203
    %209 = vst [vmem:[#allocation2 + $0x20] sm:$0xff] %v204
    %210 = vst [vmem:[#allocation3] sm:$0xff] 0.0
    %211 = vst [vmem:[#allocation3 + $0x8] sm:$0xff] 0.0
    %212 = vst [vmem:[#allocation3 + $0x10] sm:$0xff] 0.0
    %213 = vst [vmem:[#allocation3 + $0x18] sm:$0xff] 0.0
    %214 = vst [vmem:[#allocation3 + $0x20] sm:$0xff] 0.0
    // While loop
    $region22: #{ofmodel_forward.1} parent=1 // loop_pre_header
      _
    $region23: #{ofmodel_forward.1} parent=1 // loop_header
      %s216 = sphi 0, %s781
      %s217 = sphi 1.0, %s626
      %s218 = sphi 1.618034, %s780
      %p219 = pphi 1, %p785
      %p220 = pneg %p219
    $region24: #{ofmodel_forward.1} parent=1 // loop_header_branch
      %222 = sbr.rel (%p220) target = $region28
    $region25: #{ofmodel_forward.1} parent=1 // loop_body
      %v223 = vld [vmem:[#allocation2] sm:$0xff]
      %v224 = vld [vmem:[#allocation2 + $0x8] sm:$0xff]
      %v225 = vld [vmem:[#allocation2 + $0x10] sm:$0xff]
      %v226 = vld [vmem:[#allocation2 + $0x18] sm:$0xff]
      %v227 = vld [vmem:[#allocation2 + $0x20] sm:$0xff]
      %v228 = vld [vmem:[#allocation3] sm:$0xff]
      %v229 = vld [vmem:[#allocation3 + $0x8] sm:$0xff]
      %v230 = vld [vmem:[#allocation3 + $0x10] sm:$0xff]
      %v231 = vld [vmem:[#allocation3 + $0x18] sm:$0xff]
      %v232 = vld [vmem:[#allocation3 + $0x20] sm:$0xff]
      %s233 = ssub.f32 %s217, 1.0
      %v234 = vstv %s218
      %v235 = vrcp.pop %v234
      %s236 = vtos %v235
      %s237 = smul.f32 %s233, %s236
      %s238 = sadd.f32 %s237, 1.0
      %v239 = vstv %s238
      %v240 = vmul.f32 %v223, %v239
      %v241 = vmul.f32 %v224, %v239
      %v242 = vmul.f32 %v225, %v239
      %v243 = vmul.f32 %v226, %v239
      %v244 = vmul.f32 %v227, %v239
      %v245 = vstv %s237
      %v246 = vmul.f32 %v228, %v245
      %v247 = vmul.f32 %v229, %v245
      %v248 = vmul.f32 %v230, %v245
      %v249 = vmul.f32 %v231, %v245
      %v250 = vmul.f32 %v232, %v245
      %v251 = vsub.f32 %v240, %v246
      %v252 = vsub.f32 %v241, %v247
      %v253 = vsub.f32 %v242, %v248
      %v254 = vsub.f32 %v243, %v249
      %v255 = vsub.f32 %v244, %v250
      %v256 = vpack.c.bf16 %v252, %v251
      %v257 = vpack.c.bf16 %v254, %v253
      %v258 = vpack.c.bf16 %v255, %v255
      %vm259 = vcmask 326656
      %v261 = vsel %vm259, %v39, 0
      %v264 = vsel %vm259, %v40, 0
      %v267 = vsel %vm259, %v41, 0
      %vm269 = vcmask 1043456
      %v271 = vsel %vm269, %v258, 0
      %273 = vmatprep.subr.bf16.mxu0 0
      %274 = vmatpush1.bf16.msra.mxu0 0
      %275 = vmatprep.subr.bf16.mxu0 0
      %276 = vmatpush1.bf16.msra.mxu0 0
      %277 = vmatprep.subr.bf16.mxu0 0
      %278 = vmatpush1.bf16.msra.mxu0 0
      %279 = vmatprep.subr.bf16.mxu0 0
      %280 = vmatpush1.bf16.msra.mxu0 0
      %281 = vmatprep.subr.bf16.mxu0 0
      %282 = vmatpush1.bf16.msra.mxu0 0
      %283 = vmatprep.subr.bf16.mxu0 0
      %284 = vmatpush1.bf16.msra.mxu0 %v271
      %285 = vmatprep.subr.bf16.mxu0 0
      %286 = vmatpush1.bf16.msra.mxu0 %v257
      %287 = vmatprep.subr.bf16.mxu0 0
      %288 = vmatpush1.bf16.msra.mxu0 %v256
      %289 = vmatprep.subr.bf16.mxu0 0
      %290 = vmatpush2.bf16.msra.mxu0 0
      %291 = vmatprep.subr.bf16.mxu0 0
      %292 = vmatpush2.bf16.msra.mxu0 0
      %293 = vmatprep.subr.bf16.mxu0 0
      %294 = vmatpush2.bf16.msra.mxu0 0
      %295 = vmatprep.subr.bf16.mxu0 0
      %296 = vmatpush2.bf16.msra.mxu0 0
      %297 = vmatprep.subr.bf16.mxu0 0
      %298 = vmatpush2.bf16.msra.mxu0 0
      %299 = vmatprep.subr.bf16.mxu0 0
      %300 = vmatpush2.bf16.msra.mxu0 0
      %301 = vmatprep.subr.bf16.mxu0 0
      %302 = vmatpush2.bf16.msra.mxu0 0
      %303 = vmatprep.subr.bf16.mxu0 0
      %304 = vmatpush2.bf16.msra.mxu0 0
      %305 = vmatprep.mubr.bf16.mxu0 0
      %306 = vmatmul.mubr.bf16.gmra.mxu0 %v261
      %v307 = vpop.f32.mrf.mxu0
      %v308 = vadd.f32 %v182, %v307
      %v309 = vpop.f32.mrf.mxu0
      %v310 = vpop.f32.mrf.mxu0
      %v311 = vadd.f32 %v183, %v310
      %v312 = vpop.f32.mrf.mxu0
      %313 = vmatprep.mubr.bf16.mxu0 0
      %314 = vmatmul.mubr.bf16.gmra.mxu0 %v264
      %v315 = vpop.f32.mrf.mxu0
      %v316 = vadd.f32 %v184, %v315
      %v317 = vpop.f32.mrf.mxu0
      %v318 = vpop.f32.mrf.mxu0
      %v319 = vadd.f32 %v185, %v318
      %v320 = vpop.f32.mrf.mxu0
      %321 = vmatprep.mubr.bf16.mxu0 0
      %322 = vmatmul.mubr.bf16.gmra.mxu0 %v267
      %v323 = vpop.f32.mrf.mxu0
      %v324 = vadd.f32 %v186, %v323
      %v325 = vpop.f32.mrf.mxu0
      %v326 = vpop.f32.mrf.mxu0
      %v327 = vpop.f32.mrf.mxu0
      %328 = vdwg.mxu0
      %v329 = vmax.f32 %v188, %v308
      %v330 = vmax.f32 %v188, %v311
      %v331 = vmax.f32 %v188, %v316
      %v332 = vmax.f32 %v188, %v319
      %v333 = vmax.f32 %v188, %v324
      %v334 = vmin.f32 %v194, %v329
      %v335 = vmin.f32 %v194, %v330
      %v336 = vmin.f32 %v194, %v331
      %v337 = vmin.f32 %v194, %v332
      %v338 = vmin.f32 %v194, %v333
      %v339 = vsub.f32 %v308, %v334
      %v340 = vsub.f32 %v311, %v335
      %v341 = vsub.f32 %v316, %v336
      %v342 = vsub.f32 %v319, %v337
      %v343 = vsub.f32 %v324, %v338
      %344 = vst [vmem:[#allocation3] sm:$0xff] %v339
      %345 = vst [vmem:[#allocation3 + $0x8] sm:$0xff] %v340
      %346 = vst [vmem:[#allocation3 + $0x10] sm:$0xff] %v341
      %347 = vst [vmem:[#allocation3 + $0x18] sm:$0xff] %v342
      %348 = vst [vmem:[#allocation3 + $0x20] sm:$0xff] %v343
      %s349 = smul.f32 %s218, 4.0
      %s350 = smul.f32 %s349, %s218
      %s351 = sadd.f32 %s350, 1.0
      %v352 = vstv %s351
      %v353 = vrsqrt.pop %v352
      %v354 = vmul.f32 %v352, %v353
      %vm355 = vcmp.eq.f32.partialorder %v352, inf
      %v356 = vsel %vm355, %v352, %v354
      %vm357 = vcmp.eq.f32.partialorder %v352, 0.0
      %v358 = vand.u32 %v352, 2147483648
      %v359 = vsel %vm357, %v358, %v356
      %s360 = vtos %v359
      %s361 = sadd.f32 %s360, 1.0
      %v362 = vrcp.pop 2.0
      %s363 = vtos %v362
      %s364 = smul.f32 %s361, %s363
      %v365 = vld [vmem:[#allocation3] sm:$0xff]
      %v366 = vld [vmem:[#allocation3 + $0x8] sm:$0xff]
      %v367 = vld [vmem:[#allocation3 + $0x10] sm:$0xff]
      %v368 = vld [vmem:[#allocation3 + $0x18] sm:$0xff]
      %v369 = vld [vmem:[#allocation3 + $0x20] sm:$0xff]
      %v370 = vld [vmem:[#allocation2] sm:$0xff]
      %v371 = vld [vmem:[#allocation2 + $0x8] sm:$0xff]
      %v372 = vld [vmem:[#allocation2 + $0x10] sm:$0xff]
      %v373 = vld [vmem:[#allocation2 + $0x18] sm:$0xff]
      %v374 = vld [vmem:[#allocation2 + $0x20] sm:$0xff]
      %s375 = ssub.f32 %s218, 1.0
      %v376 = vstv %s364
      %v377 = vrcp.pop %v376
      %s378 = vtos %v377
      %s379 = smul.f32 %s375, %s378
      %s380 = sadd.f32 %s379, 1.0
      %v381 = vstv %s380
      %v382 = vmul.f32 %v365, %v381
      %v383 = vmul.f32 %v366, %v381
      %v384 = vmul.f32 %v367, %v381
      %v385 = vmul.f32 %v368, %v381
      %v386 = vmul.f32 %v369, %v381
      %v387 = vstv %s379
      %v388 = vmul.f32 %v370, %v387
      %v389 = vmul.f32 %v371, %v387
      %v390 = vmul.f32 %v372, %v387
      %v391 = vmul.f32 %v373, %v387
      %v392 = vmul.f32 %v374, %v387
      %v393 = vsub.f32 %v382, %v388
      %v394 = vsub.f32 %v383, %v389
      %v395 = vsub.f32 %v384, %v390
      %v396 = vsub.f32 %v385, %v391
      %v397 = vsub.f32 %v386, %v392
      %v398 = vpack.c.bf16 %v394, %v393
      %v399 = vpack.c.bf16 %v396, %v395
      %v400 = vpack.c.bf16 %v397, %v397
      %v402 = vsel %vm269, %v400, 0
      %404 = vmatprep.subr.bf16.mxu0 0
      %405 = vmatpush1.bf16.msra.mxu0 0
      %406 = vmatprep.subr.bf16.mxu0 0
      %407 = vmatpush1.bf16.msra.mxu0 0
      %408 = vmatprep.subr.bf16.mxu0 0
      %409 = vmatpush1.bf16.msra.mxu0 0
      %410 = vmatprep.subr.bf16.mxu0 0
      %411 = vmatpush1.bf16.msra.mxu0 0
      %412 = vmatprep.subr.bf16.mxu0 0
      %413 = vmatpush1.bf16.msra.mxu0 0
      %414 = vmatprep.subr.bf16.mxu0 0
      %415 = vmatpush1.bf16.msra.mxu0 %v402
      %416 = vmatprep.subr.bf16.mxu0 0
      %417 = vmatpush1.bf16.msra.mxu0 %v399
      %418 = vmatprep.subr.bf16.mxu0 0
      %419 = vmatpush1.bf16.msra.mxu0 %v398
      %420 = vmatprep.subr.bf16.mxu0 0
      %421 = vmatpush2.bf16.msra.mxu0 0
      %422 = vmatprep.subr.bf16.mxu0 0
      %423 = vmatpush2.bf16.msra.mxu0 0
      %424 = vmatprep.subr.bf16.mxu0 0
      %425 = vmatpush2.bf16.msra.mxu0 0
      %426 = vmatprep.subr.bf16.mxu0 0
      %427 = vmatpush2.bf16.msra.mxu0 0
      %428 = vmatprep.subr.bf16.mxu0 0
      %429 = vmatpush2.bf16.msra.mxu0 0
      %430 = vmatprep.subr.bf16.mxu0 0
      %431 = vmatpush2.bf16.msra.mxu0 0
      %432 = vmatprep.subr.bf16.mxu0 0
      %433 = vmatpush2.bf16.msra.mxu0 0
      %434 = vmatprep.subr.bf16.mxu0 0
      %435 = vmatpush2.bf16.msra.mxu0 0
      %436 = vmatprep.mubr.bf16.mxu0 0
      %437 = vmatmul.mubr.bf16.gmra.mxu0 %v261
      %v438 = vpop.f32.mrf.mxu0
      %v439 = vadd.f32 %v182, %v438
      %v440 = vpop.f32.mrf.mxu0
      %v441 = vpop.f32.mrf.mxu0
      %v442 = vadd.f32 %v183, %v441
      %v443 = vpop.f32.mrf.mxu0
      %444 = vmatprep.mubr.bf16.mxu0 0
      %445 = vmatmul.mubr.bf16.gmra.mxu0 %v264
      %v446 = vpop.f32.mrf.mxu0
      %v447 = vadd.f32 %v184, %v446
      %v448 = vpop.f32.mrf.mxu0
      %v449 = vpop.f32.mrf.mxu0
      %v450 = vadd.f32 %v185, %v449
      %v451 = vpop.f32.mrf.mxu0
      %452 = vmatprep.mubr.bf16.mxu0 0
      %453 = vmatmul.mubr.bf16.gmra.mxu0 %v267
      %v454 = vpop.f32.mrf.mxu0
      %v455 = vadd.f32 %v186, %v454
      %v456 = vpop.f32.mrf.mxu0
      %v457 = vpop.f32.mrf.mxu0
      %v458 = vpop.f32.mrf.mxu0
      %459 = vdwg.mxu0
      %v460 = vmax.f32 %v188, %v439
      %v461 = vmax.f32 %v188, %v442
      %v462 = vmax.f32 %v188, %v447
      %v463 = vmax.f32 %v188, %v450
      %v464 = vmax.f32 %v188, %v455
      %v465 = vmin.f32 %v194, %v460
      %v466 = vmin.f32 %v194, %v461
      %v467 = vmin.f32 %v194, %v462
      %v468 = vmin.f32 %v194, %v463
      %v469 = vmin.f32 %v194, %v464
      %v470 = vsub.f32 %v439, %v465
      %v471 = vsub.f32 %v442, %v466
      %v472 = vsub.f32 %v447, %v467
      %v473 = vsub.f32 %v450, %v468
      %v474 = vsub.f32 %v455, %v469
      %475 = vst [vmem:[#allocation2] sm:$0xff] %v470
      %476 = vst [vmem:[#allocation2 + $0x8] sm:$0xff] %v471
      %477 = vst [vmem:[#allocation2 + $0x10] sm:$0xff] %v472
      %478 = vst [vmem:[#allocation2 + $0x18] sm:$0xff] %v473
      %479 = vst [vmem:[#allocation2 + $0x20] sm:$0xff] %v474
      %s480 = smul.f32 %s364, 4.0
      %s481 = smul.f32 %s480, %s364
      %s482 = sadd.f32 %s481, 1.0
      %v483 = vstv %s482
      %v484 = vrsqrt.pop %v483
      %v485 = vmul.f32 %v483, %v484
      %vm486 = vcmp.eq.f32.partialorder %v483, inf
      %v487 = vsel %vm486, %v483, %v485
      %vm488 = vcmp.eq.f32.partialorder %v483, 0.0
      %v489 = vand.u32 %v483, 2147483648
      %v490 = vsel %vm488, %v489, %v487
      %s491 = vtos %v490
      %s492 = sadd.f32 %s491, 1.0
      %v493 = vrcp.pop 2.0
      %s494 = vtos %v493
      %s495 = smul.f32 %s492, %s494
      %v496 = vld [vmem:[#allocation2] sm:$0xff]
      %v497 = vld [vmem:[#allocation2 + $0x8] sm:$0xff]
      %v498 = vld [vmem:[#allocation2 + $0x10] sm:$0xff]
      %v499 = vld [vmem:[#allocation2 + $0x18] sm:$0xff]
      %v500 = vld [vmem:[#allocation2 + $0x20] sm:$0xff]
      %v501 = vld [vmem:[#allocation3] sm:$0xff]
      %v502 = vld [vmem:[#allocation3 + $0x8] sm:$0xff]
      %v503 = vld [vmem:[#allocation3 + $0x10] sm:$0xff]
      %v504 = vld [vmem:[#allocation3 + $0x18] sm:$0xff]
      %v505 = vld [vmem:[#allocation3 + $0x20] sm:$0xff]
      %s506 = ssub.f32 %s364, 1.0
      %v507 = vstv %s495
      %v508 = vrcp.pop %v507
      %s509 = vtos %v508
      %s510 = smul.f32 %s506, %s509
      %s511 = sadd.f32 %s510, 1.0
      %v512 = vstv %s511
      %v513 = vmul.f32 %v496, %v512
      %v514 = vmul.f32 %v497, %v512
      %v515 = vmul.f32 %v498, %v512
      %v516 = vmul.f32 %v499, %v512
      %v517 = vmul.f32 %v500, %v512
      %v518 = vstv %s510
      %v519 = vmul.f32 %v501, %v518
      %v520 = vmul.f32 %v502, %v518
      %v521 = vmul.f32 %v503, %v518
      %v522 = vmul.f32 %v504, %v518
      %v523 = vmul.f32 %v505, %v518
      %v524 = vsub.f32 %v513, %v519
      %v525 = vsub.f32 %v514, %v520
      %v526 = vsub.f32 %v515, %v521
      %v527 = vsub.f32 %v516, %v522
      %v528 = vsub.f32 %v517, %v523
      %v529 = vpack.c.bf16 %v525, %v524
      %v530 = vpack.c.bf16 %v527, %v526
      %v531 = vpack.c.bf16 %v528, %v528
      %v533 = vsel %vm269, %v531, 0
      %535 = vmatprep.subr.bf16.mxu0 0
      %536 = vmatpush1.bf16.msra.mxu0 0
      %537 = vmatprep.subr.bf16.mxu0 0
      %538 = vmatpush1.bf16.msra.mxu0 0
      %539 = vmatprep.subr.bf16.mxu0 0
      %540 = vmatpush1.bf16.msra.mxu0 0
      %541 = vmatprep.subr.bf16.mxu0 0
      %542 = vmatpush1.bf16.msra.mxu0 0
      %543 = vmatprep.subr.bf16.mxu0 0
      %544 = vmatpush1.bf16.msra.mxu0 0
      %545 = vmatprep.subr.bf16.mxu0 0
      %546 = vmatpush1.bf16.msra.mxu0 %v533
      %547 = vmatprep.subr.bf16.mxu0 0
      %548 = vmatpush1.bf16.msra.mxu0 %v530
      %549 = vmatprep.subr.bf16.mxu0 0
      %550 = vmatpush1.bf16.msra.mxu0 %v529
      %551 = vmatprep.subr.bf16.mxu0 0
      %552 = vmatpush2.bf16.msra.mxu0 0
      %553 = vmatprep.subr.bf16.mxu0 0
      %554 = vmatpush2.bf16.msra.mxu0 0
      %555 = vmatprep.subr.bf16.mxu0 0
      %556 = vmatpush2.bf16.msra.mxu0 0
      %557 = vmatprep.subr.bf16.mxu0 0
      %558 = vmatpush2.bf16.msra.mxu0 0
      %559 = vmatprep.subr.bf16.mxu0 0
      %560 = vmatpush2.bf16.msra.mxu0 0
      %561 = vmatprep.subr.bf16.mxu0 0
      %562 = vmatpush2.bf16.msra.mxu0 0
      %563 = vmatprep.subr.bf16.mxu0 0
      %564 = vmatpush2.bf16.msra.mxu0 0
      %565 = vmatprep.subr.bf16.mxu0 0
      %566 = vmatpush2.bf16.msra.mxu0 0
      %567 = vmatprep.mubr.bf16.mxu0 0
      %568 = vmatmul.mubr.bf16.gmra.mxu0 %v261
      %v569 = vpop.f32.mrf.mxu0
      %v570 = vadd.f32 %v182, %v569
      %v571 = vpop.f32.mrf.mxu0
      %v572 = vpop.f32.mrf.mxu0
      %v573 = vadd.f32 %v183, %v572
      %v574 = vpop.f32.mrf.mxu0
      %575 = vmatprep.mubr.bf16.mxu0 0
      %576 = vmatmul.mubr.bf16.gmra.mxu0 %v264
      %v577 = vpop.f32.mrf.mxu0
      %v578 = vadd.f32 %v184, %v577
      %v579 = vpop.f32.mrf.mxu0
      %v580 = vpop.f32.mrf.mxu0
      %v581 = vadd.f32 %v185, %v580
      %v582 = vpop.f32.mrf.mxu0
      %583 = vmatprep.mubr.bf16.mxu0 0
      %584 = vmatmul.mubr.bf16.gmra.mxu0 %v267
      %v585 = vpop.f32.mrf.mxu0
      %v586 = vadd.f32 %v186, %v585
      %v587 = vpop.f32.mrf.mxu0
      %v588 = vpop.f32.mrf.mxu0
      %v589 = vpop.f32.mrf.mxu0
      %590 = vdwg.mxu0
      %v591 = vmax.f32 %v188, %v570
      %v592 = vmax.f32 %v188, %v573
      %v593 = vmax.f32 %v188, %v578
      %v594 = vmax.f32 %v188, %v581
      %v595 = vmax.f32 %v188, %v586
      %v596 = vmin.f32 %v194, %v591
      %v597 = vmin.f32 %v194, %v592
      %v598 = vmin.f32 %v194, %v593
      %v599 = vmin.f32 %v194, %v594
      %v600 = vmin.f32 %v194, %v595
      %v601 = vsub.f32 %v570, %v596
      %v602 = vsub.f32 %v573, %v597
      %v603 = vsub.f32 %v578, %v598
      %v604 = vsub.f32 %v581, %v599
      %v605 = vsub.f32 %v586, %v600
      %606 = vst [vmem:[#allocation3] sm:$0xff] %v601
      %607 = vst [vmem:[#allocation3 + $0x8] sm:$0xff] %v602
      %608 = vst [vmem:[#allocation3 + $0x10] sm:$0xff] %v603
      %609 = vst [vmem:[#allocation3 + $0x18] sm:$0xff] %v604
      %610 = vst [vmem:[#allocation3 + $0x20] sm:$0xff] %v605
      %s611 = smul.f32 %s495, 4.0
      %s612 = smul.f32 %s611, %s495
      %s613 = sadd.f32 %s612, 1.0
      %v614 = vstv %s613
      %v615 = vrsqrt.pop %v614
      %v616 = vmul.f32 %v614, %v615
      %vm617 = vcmp.eq.f32.partialorder %v614, inf
      %v618 = vsel %vm617, %v614, %v616
      %vm619 = vcmp.eq.f32.partialorder %v614, 0.0
      %v620 = vand.u32 %v614, 2147483648
      %v621 = vsel %vm619, %v620, %v618
      %s622 = vtos %v621
      %s623 = sadd.f32 %s622, 1.0
      %v624 = vrcp.pop 2.0
      %s625 = vtos %v624
      %s626 = smul.f32 %s623, %s625
      %v627 = vld [vmem:[#allocation3] sm:$0xff]
      %v628 = vld [vmem:[#allocation3 + $0x8] sm:$0xff]
      %v629 = vld [vmem:[#allocation3 + $0x10] sm:$0xff]
      %v630 = vld [vmem:[#allocation3 + $0x18] sm:$0xff]
      %v631 = vld [vmem:[#allocation3 + $0x20] sm:$0xff]
      %v632 = vld [vmem:[#allocation2] sm:$0xff]
      %v633 = vld [vmem:[#allocation2 + $0x8] sm:$0xff]
      %v634 = vld [vmem:[#allocation2 + $0x10] sm:$0xff]
      %v635 = vld [vmem:[#allocation2 + $0x18] sm:$0xff]
      %v636 = vld [vmem:[#allocation2 + $0x20] sm:$0xff]
      %s637 = ssub.f32 %s495, 1.0
      %v638 = vstv %s626
      %v639 = vrcp.pop %v638
      %s640 = vtos %v639
      %s641 = smul.f32 %s637, %s640
      %s642 = sadd.f32 %s641, 1.0
      %v643 = vstv %s642
      %v644 = vmul.f32 %v627, %v643
      %v645 = vmul.f32 %v628, %v643
      %v646 = vmul.f32 %v629, %v643
      %v647 = vmul.f32 %v630, %v643
      %v648 = vmul.f32 %v631, %v643
      %v649 = vstv %s641
      %v650 = vmul.f32 %v632, %v649
      %v651 = vmul.f32 %v633, %v649
      %v652 = vmul.f32 %v634, %v649
      %v653 = vmul.f32 %v635, %v649
      %v654 = vmul.f32 %v636, %v649
      %v655 = vsub.f32 %v644, %v650
      %v656 = vsub.f32 %v645, %v651
      %v657 = vsub.f32 %v646, %v652
      %v658 = vsub.f32 %v647, %v653
      %v659 = vsub.f32 %v648, %v654
      %v660 = vpack.c.bf16 %v656, %v655
      %v661 = vpack.c.bf16 %v658, %v657
      %v662 = vpack.c.bf16 %v659, %v659
      %v664 = vsel %vm269, %v662, 0
      %666 = vmatprep.subr.bf16.mxu0 0
      %667 = vmatpush1.bf16.msra.mxu0 0
      %668 = vmatprep.subr.bf16.mxu0 0
      %669 = vmatpush1.bf16.msra.mxu0 0
      %670 = vmatprep.subr.bf16.mxu0 0
      %671 = vmatpush1.bf16.msra.mxu0 0
      %672 = vmatprep.subr.bf16.mxu0 0
      %673 = vmatpush1.bf16.msra.mxu0 0
      %674 = vmatprep.subr.bf16.mxu0 0
      %675 = vmatpush1.bf16.msra.mxu0 0
      %676 = vmatprep.subr.bf16.mxu0 0
      %677 = vmatpush1.bf16.msra.mxu0 %v664
      %678 = vmatprep.subr.bf16.mxu0 0
      %679 = vmatpush1.bf16.msra.mxu0 %v661
      %680 = vmatprep.subr.bf16.mxu0 0
      %681 = vmatpush1.bf16.msra.mxu0 %v660
      %682 = vmatprep.subr.bf16.mxu0 0
      %683 = vmatpush2.bf16.msra.mxu0 0
      %684 = vmatprep.subr.bf16.mxu0 0
      %685 = vmatpush2.bf16.msra.mxu0 0
      %686 = vmatprep.subr.bf16.mxu0 0
      %687 = vmatpush2.bf16.msra.mxu0 0
      %688 = vmatprep.subr.bf16.mxu0 0
      %689 = vmatpush2.bf16.msra.mxu0 0
      %690 = vmatprep.subr.bf16.mxu0 0
      %691 = vmatpush2.bf16.msra.mxu0 0
      %692 = vmatprep.subr.bf16.mxu0 0
      %693 = vmatpush2.bf16.msra.mxu0 0
      %694 = vmatprep.subr.bf16.mxu0 0
      %695 = vmatpush2.bf16.msra.mxu0 0
      %696 = vmatprep.subr.bf16.mxu0 0
      %697 = vmatpush2.bf16.msra.mxu0 0
      %698 = vmatprep.mubr.bf16.mxu0 0
      %699 = vmatmul.mubr.bf16.gmra.mxu0 %v261
      %v700 = vpop.f32.mrf.mxu0
      %v701 = vadd.f32 %v182, %v700
      %v702 = vpop.f32.mrf.mxu0
      %v703 = vpop.f32.mrf.mxu0
      %v704 = vadd.f32 %v183, %v703
      %v705 = vpop.f32.mrf.mxu0
      %706 = vmatprep.mubr.bf16.mxu0 0
      %707 = vmatmul.mubr.bf16.gmra.mxu0 %v264
      %v708 = vpop.f32.mrf.mxu0
      %v709 = vadd.f32 %v184, %v708
      %v710 = vpop.f32.mrf.mxu0
      %v711 = vpop.f32.mrf.mxu0
      %v712 = vadd.f32 %v185, %v711
      %v713 = vpop.f32.mrf.mxu0
      %714 = vmatprep.mubr.bf16.mxu0 0
      %715 = vmatmul.mubr.bf16.gmra.mxu0 %v267
      %v716 = vpop.f32.mrf.mxu0
      %v717 = vadd.f32 %v186, %v716
      %v718 = vpop.f32.mrf.mxu0
      %v719 = vpop.f32.mrf.mxu0
      %v720 = vpop.f32.mrf.mxu0
      %721 = vdwg.mxu0
      %v722 = vmax.f32 %v188, %v701
      %v723 = vmax.f32 %v188, %v704
      %v724 = vmax.f32 %v188, %v709
      %v725 = vmax.f32 %v188, %v712
      %v726 = vmax.f32 %v188, %v717
      %v727 = vmin.f32 %v194, %v722
      %v728 = vmin.f32 %v194, %v723
      %v729 = vmin.f32 %v194, %v724
      %v730 = vmin.f32 %v194, %v725
      %v731 = vmin.f32 %v194, %v726
      %v732 = vsub.f32 %v701, %v727
      %v733 = vsub.f32 %v704, %v728
      %v734 = vsub.f32 %v709, %v729
      %v735 = vsub.f32 %v712, %v730
      %v736 = vsub.f32 %v717, %v731
      %737 = vst [vmem:[#allocation2] sm:$0xff] %v732
      %738 = vst [vmem:[#allocation2 + $0x8] sm:$0xff] %v733
      %739 = vst [vmem:[#allocation2 + $0x10] sm:$0xff] %v734
      %740 = vst [vmem:[#allocation2 + $0x18] sm:$0xff] %v735
      %741 = vst [vmem:[#allocation2 + $0x20] sm:$0xff] %v736
      %v742 = vsub.f32 %v732, %v627
      %v743 = vsub.f32 %v733, %v628
      %v744 = vsub.f32 %v734, %v629
      %v745 = vsub.f32 %v735, %v630
      %v746 = vsub.f32 %v736, %v631
      %v747 = vmul.f32 %v742, %v742
      %v748 = vmul.f32 %v743, %v743
      %v749 = vmul.f32 %v744, %v744
      %v750 = vmul.f32 %v745, %v745
      %v751 = vmul.f32 %v746, %v746
      %v752 = vadd.f32 %v747, %v748
      %v753 = vadd.f32 %v752, %v749
      %v754 = vadd.f32 %v753, %v750
      %v755 = vadd.f32 %v754, %v751
      %756 = vadd.xlane.f32.xlu0 %v755
      %v757 = vpop.xlane.xlu0 %756
      %v758 = vrot.slane %v757, 4
      %v759 = vadd.f32 %v757, %v758
      %v760 = vrot.slane %v759, 2
      %v761 = vadd.f32 %v759, %v760
      %v762 = vrot.slane %v761, 1
      %v763 = vadd.f32 %v761, %v762
      %s764 = vtos %v763
      %s765 = smul.f32 %s626, 4.0
      %s766 = smul.f32 %s765, %s626
      %s767 = sadd.f32 %s766, 1.0
      %v768 = vstv %s767
      %v769 = vrsqrt.pop %v768
      %v770 = vmul.f32 %v768, %v769
      %vm771 = vcmp.eq.f32.partialorder %v768, inf
      %v772 = vsel %vm771, %v768, %v770
      %vm773 = vcmp.eq.f32.partialorder %v768, 0.0
      %v774 = vand.u32 %v768, 2147483648
      %v775 = vsel %vm773, %v774, %v772
      %s776 = vtos %v775
      %s777 = sadd.f32 %s776, 1.0
      %v778 = vrcp.pop 2.0
      %s779 = vtos %v778
      %s780 = smul.f32 %s777, %s779
      %s781 = sadd.s32 %s216, 1
      %p782 = scmp.lt.s32.totalorder %s781, 25
      %p783 = scmp.ge.f32.partialorder %s764, 1.089e-05
      %p784 = pnand %p782, %p783
      %p785 = pneg %p784
    $region26: #{ofmodel_forward.1} parent=1 // loop_footer
      _
    $region27: #{ofmodel_forward.1} parent=1 // loop_footer_branch
      %215 = sbr.rel target = $region23
    $region28: #{ofmodel_forward.1} parent=1 // loop_exit
      _
    %v786 = vld [vmem:[#allocation2] sm:$0xff]
    %v787 = vld [vmem:[#allocation2 + $0x8] sm:$0xff]
    %v788 = vld [vmem:[#allocation2 + $0x10] sm:$0xff]
    %v789 = vld [vmem:[#allocation2 + $0x18] sm:$0xff]
    %v790 = vld [vmem:[#allocation2 + $0x20] sm:$0xff]
    %vm791 = vcmask 326656
    %v793 = vsel %vm791, %v33, 0
    %795 = vmatprep.subr.mxu0 0.0
    %796 = vmatpush1.msra.mxu0 0.0
    %797 = vmatprep.subr.mxu0 0.0
    %798 = vmatpush1.msra.mxu0 0.0
    %799 = vmatprep.subr.mxu0 0.0
    %800 = vmatpush1.msra.mxu0 0.0
    %801 = vmatprep.subr.mxu0 0.0
    %802 = vmatpush1.msra.mxu0 0.0
    %803 = vmatprep.subr.mxu0 0.0
    %804 = vmatpush1.msra.mxu0 0.0
    %805 = vmatprep.subr.mxu0 0.0
    %806 = vmatpush1.msra.mxu0 0.0
    %807 = vmatprep.subr.mxu0 0.0
    %808 = vmatpush1.msra.mxu0 0.0
    %809 = vmatprep.subr.mxu0 0.0
    %810 = vmatpush1.msra.mxu0 0.0
    %811 = vmatprep.subr.mxu0 0.0
    %812 = vmatpush1.msra.mxu0 0.0
    %813 = vmatprep.subr.mxu0 0.0
    %814 = vmatpush1.msra.mxu0 0.0
    %815 = vmatprep.subr.mxu0 0.0
    %816 = vmatpush1.msra.mxu0 0.0
    %817 = vmatprep.subr.mxu0 0.0
    %818 = vmatpush1.msra.mxu0 %v790
    %819 = vmatprep.subr.mxu0 0.0
    %820 = vmatpush1.msra.mxu0 %v789
    %821 = vmatprep.subr.mxu0 0.0
    %822 = vmatpush1.msra.mxu0 %v788
    %823 = vmatprep.subr.mxu0 0.0
    %824 = vmatpush1.msra.mxu0 %v787
    %825 = vmatprep.subr.mxu0 0.0
    %826 = vmatpush1.msra.mxu0 %v786
    %827 = vmatprep.subr.mxu0 0.0
    %828 = vmatpush2.msra.mxu0 0.0
    %829 = vmatprep.subr.mxu0 0.0
    %830 = vmatpush2.msra.mxu0 0.0
    %831 = vmatprep.subr.mxu0 0.0
    %832 = vmatpush2.msra.mxu0 0.0
    %833 = vmatprep.subr.mxu0 0.0
    %834 = vmatpush2.msra.mxu0 0.0
    %835 = vmatprep.subr.mxu0 0.0
    %836 = vmatpush2.msra.mxu0 0.0
    %837 = vmatprep.subr.mxu0 0.0
    %838 = vmatpush2.msra.mxu0 0.0
    %839 = vmatprep.subr.mxu0 0.0
    %840 = vmatpush2.msra.mxu0 0.0
    %841 = vmatprep.subr.mxu0 0.0
    %842 = vmatpush2.msra.mxu0 0.0
    %843 = vmatprep.subr.mxu0 0.0
    %844 = vmatpush2.msra.mxu0 0.0
    %845 = vmatprep.subr.mxu0 0.0
    %846 = vmatpush2.msra.mxu0 0.0
    %847 = vmatprep.subr.mxu0 0.0
    %848 = vmatpush2.msra.mxu0 0.0
    %849 = vmatprep.subr.mxu0 0.0
    %850 = vmatpush2.msra.mxu0 0.0
    %851 = vmatprep.subr.mxu0 0.0
    %852 = vmatpush2.msra.mxu0 0.0
    %853 = vmatprep.subr.mxu0 0.0
    %854 = vmatpush2.msra.mxu0 0.0
    %855 = vmatprep.subr.mxu0 0.0
    %856 = vmatpush2.msra.mxu0 0.0
    %857 = vmatprep.subr.mxu0 0.0
    %858 = vmatpush2.msra.mxu0 0.0
    %859 = vmatprep.mubr.f32.mxu0 0.0
    %860 = vmatmul.mubr.f32.gmra.mxu0 %v793
    %v861 = vpop.f32.mrf.mxu0
    %v862 = vadd.f32 0.0, %v861
    %v863 = vpop.f32.mrf.mxu0
    %864 = vdwg.mxu0
    %865 = vst [vmem:[%s4] sm:$0xff] %v862
    // Predicated region
    $region29: #{ofmodel_forward.1} parent=1 // pred_check
      _
    $region30: #{ofmodel_forward.1} parent=1 // pred_check_branch
      %867 = sbr.rel (0) target = $region32
    $region31: #{ofmodel_forward.1} parent=1 // pred_region
      _
    $region32: #{ofmodel_forward.1} parent=1 // pred_fallthru
      _
    // Predicated region
    $region33: #{ofmodel_forward.1} parent=1 // pred_check
      _
    $region34: #{ofmodel_forward.1} parent=1 // pred_check_branch
      %869 = sbr.rel (0) target = $region36
    $region35: #{ofmodel_forward.1} parent=1 // pred_region
      _
    $region36: #{ofmodel_forward.1} parent=1 // pred_fallthru
      _
    %870 = vsyncpa [#allocation5], 1

</llo_original>
